<compile_context>
chip_gen: v7x
topology: tpu7x:2x2x1
jax: 0.10.0
libtpu: 0.0.40
codegen_flags: <defaults>
</compile_context>

<pallas_src>
import functools
import math

import jax
import jax.numpy as jnp
from jax import lax
from jax.experimental import pallas as pl
from jax.experimental.pallas import tpu as pltpu

_MIB = 1024 * 1024
_HAS_BUFFERED = hasattr(pl, "Buffered")


def _lm_head_kernel(x_ref, w1_ref, b1_ref, g_ref, beta_ref, w2_ref, b2_ref,
                    o_ref, h_scratch, *, eps):
    j = pl.program_id(1)

    @pl.when(j == 0)
    def _():
        # dense: x @ W1 + b1 (operands in their given dtype, f32 accumulation)
        h = jnp.dot(x_ref[...], w1_ref[...],
                    preferred_element_type=jnp.float32)
        h = h + b1_ref[...].astype(jnp.float32)
        # exact GELU (erf form, matches torch.nn.GELU() default) -- f32
        h = 0.5 * h * (1.0 + lax.erf(h * 0.7071067811865476))
        # LayerNorm over hidden axis (biased variance, like nn.LayerNorm) -- f32
        mu = jnp.mean(h, axis=-1, keepdims=True)
        var = jnp.mean((h - mu) * (h - mu), axis=-1, keepdims=True)
        hn = (h - mu) * lax.rsqrt(var + eps)
        hn = hn * g_ref[...].astype(jnp.float32) + beta_ref[...].astype(jnp.float32)
        # Cast once per row tile into the decoder dtype; every vocab tile reads
        # the already-cast activations (no per-tile VALU cast, half the VMEM).
        h_scratch[...] = hn.astype(h_scratch.dtype)

    # decoder: h_norm @ W2 + b2 for this vocab tile (MXU, f32 accumulation).
    acc = jnp.dot(h_scratch[...], w2_ref[...],
                  preferred_element_type=jnp.float32)
    o_ref[...] = (acc + b2_ref[...].astype(jnp.float32)).astype(o_ref.dtype)


def _round_up(x, m):
    return (x + m - 1) // m * m


def _nbytes(shape, dtype):
    return int(math.prod(shape)) * jnp.dtype(dtype).itemsize


def _spec(shape, index_map, buffers=None):
    """BlockSpec helper; `buffers` overrides the default double-buffering."""
    if buffers is not None and _HAS_BUFFERED:
        return pl.BlockSpec(shape, index_map, pipeline_mode=pl.Buffered(buffers))
    return pl.BlockSpec(shape, index_map)


def _vmem_budget_bytes():
    """Physical VMEM minus headroom for compiler-internal scratch."""
    cap = None
    try:
        cap = int(pltpu.get_tpu_info().vmem_capacity_bytes)
    except Exception:
        cap = None
    if not cap:
        try:
            kind = jax.devices()[0].device_kind.lower()
            if any(t in kind for t in ("v5 lite", "v5e", "v5litepod", "v6", "trillium")):
                cap = 128 * _MIB
        except Exception:
            cap = None
    if not cap:
        cap = 64 * _MIB  # conservative default: v7x per-TensorCore VMEM
    # keep >= 1/8 (>= 8 MiB) headroom: 64 MiB -> ~56 MiB, 128 MiB -> ~112 MiB
    return cap - max(8 * _MIB, cap // 8)


def _tile_footprint(tm, tn, H, x_dt, w1_dt, w2_dt, out_dt, scr_dt, w2_buffers):
    return (2 * _nbytes((tm, H), x_dt)               # x (double-buffered)
            + 1 * _nbytes((H, H), w1_dt)             # W1 (single-buffered)
            + 3 * _nbytes((1, H), jnp.float32)       # b1 / gamma / beta
            + w2_buffers * _nbytes((H, tn), w2_dt)   # W2 (streamed over vocab)
            + 2 * _nbytes((1, tn), jnp.float32)      # b2
            + 2 * _nbytes((tm, tn), out_dt)          # output tile
            + _nbytes((tm, H), scr_dt))              # cached LN activations


def _choose_tiles(N, H, V, x_dt, w1_dt, w2_dt, out_dt, scr_dt, budget, w2_buffers):
    n_cap = _round_up(max(N, 1), 8)
    v_cap = _round_up(max(V, 1), 128)
    # Prefer the biggest tm that fits (W2 HBM re-streaming ~ 1/tm), then the
    # biggest tn (fewer grid steps, bigger DMAs, lane-dense stores).
    tm_cands = sorted({min(c, n_cap) for c in (1024, 768, 640, 512, 384, 256, 128)},
                      reverse=True)
    tn_cands = sorted({min(c, v_cap) for c in (1024, 512, 256, 128)}, reverse=True)
    for tm in tm_cands:
        for tn in tn_cands:
            if _tile_footprint(tm, tn, H, x_dt, w1_dt, w2_dt, out_dt, scr_dt,
                               w2_buffers) <= budget:
                return tm, tn
    return tm_cands[-1], tn_cands[-1]


def lm_head(hidden_state, w1, b1, gamma, beta, w2, b2, *, eps=1e-6,
            tm=None, tn=None, w2_buffers=2, dense_dtype=None):
    """hidden_state: (B, S, H); w1: (H, H); w2: (H, V). Returns (B, S, V)."""
    B, S, H = hidden_state.shape
    V = w2.shape[1]
    N = B * S

    x = hidden_state.reshape(N, H)
    if dense_dtype is not None:
        # Optional: run the dense stage in a narrower dtype (e.g. bf16) to
        # halve W1 residency and x HBM traffic; accumulation / GELU / LN stay f32.
        x = x.astype(dense_dtype)
        w1 = w1.astype(dense_dtype)

    scratch_dtype = w2.dtype          # decoder matmul LHS lives in W2's dtype
    out_dtype = hidden_state.dtype

    budget = _vmem_budget_bytes()
    auto_tm, auto_tn = _choose_tiles(N, H, V, x.dtype, w1.dtype, w2.dtype,
                                     out_dtype, scratch_dtype, budget, w2_buffers)
    tm = auto_tm if tm is None else min(tm, _round_up(N, 8))
    tn = auto_tn if tn is None else min(tn, _round_up(V, 128))

    # Megacore / v7x: keep >= 2 row tiles so both TensorCores get work
    # (only when rows are plentiful; costs one extra W2 stream).
    if N >= 512 and _round_up(N, tm) // tm < 2:
        tm = max(128, _round_up(pl.cdiv(N, 2), 128))

    Np = _round_up(N, tm)
    Vp = _round_up(V, tn)

    if Np != N:
        x = jnp.pad(x, ((0, Np - N), (0, 0)))
    w2p = w2 if Vp == V else jnp.pad(w2, ((0, 0), (0, Vp - V)))
    b2p = b2 if Vp == V else jnp.pad(b2, ((0, Vp - V),))

    b1_2d = b1.reshape(1, H)
    g_2d = gamma.reshape(1, H)
    beta_2d = beta.reshape(1, H)
    b2_2d = b2p.reshape(1, Vp)

    kernel = functools.partial(_lm_head_kernel, eps=float(eps))

    footprint = _tile_footprint(tm, tn, H, x.dtype, w1.dtype, w2p.dtype,
                                out_dtype, scratch_dtype, w2_buffers)
    vmem_limit = int(min(budget, max(32 * _MIB, footprint * 5 // 4 + 4 * _MIB)))

    row_tiles = Np // tm
    cost = pl.CostEstimate(
        flops=int(2 * Np * H * H + 2 * Np * H * Vp),
        transcendentals=int(Np * H),
        bytes_accessed=int(_nbytes((Np, H), x.dtype)
                           + _nbytes((H, H), w1.dtype)
                           + row_tiles * _nbytes((H, Vp), w2p.dtype)  # W2 re-streamed per row tile
                           + _nbytes((Np, Vp), out_dtype)),
    )

    out = pl.pallas_call(
        kernel,
        out_shape=jax.ShapeDtypeStruct((Np, Vp), out_dtype),
        grid_spec=pltpu.PrefetchScalarGridSpec(
            num_scalar_prefetch=0,
            grid=(Np // tm, Vp // tn),
            in_specs=[
                _spec((tm, H), lambda i, j: (i, 0)),            # x (row tile)
                _spec((H, H), lambda i, j: (0, 0), buffers=1),  # W1 (grid-invariant)
                _spec((1, H), lambda i, j: (0, 0), buffers=1),  # b1
                _spec((1, H), lambda i, j: (0, 0), buffers=1),  # gamma
                _spec((1, H), lambda i, j: (0, 0), buffers=1),  # beta
                _spec((H, tn), lambda i, j: (0, j),
                      buffers=None if w2_buffers == 2 else w2_buffers),  # W2
                _spec((1, tn), lambda i, j: (0, j)),            # b2
            ],
            out_specs=pl.BlockSpec((tm, tn), lambda i, j: (i, j)),
            scratch_shapes=[pltpu.VMEM((tm, H), scratch_dtype)],
        ),
        compiler_params=pltpu.CompilerParams(
            # Rows parallel (megacore), vocab arbitrary (innermost, sequential):
            # required for the j==0 scratch-caching to be correct.
            dimension_semantics=("parallel", "arbitrary"),
            vmem_limit_bytes=vmem_limit,
        ),
        cost_estimate=cost,
    )(x, w1, b1_2d, g_2d, beta_2d, w2p, b2_2d)

    if Np != N or Vp != V:
        out = out[:N, :V]
    return out.reshape(B, S, V)


def lm_head_ref(hidden_state, w1, b1, gamma, beta, w2, b2, eps=1e-6):
    x = hidden_state.astype(jnp.float32)
    h = x @ w1.astype(jnp.float32) + b1
    h = 0.5 * h * (1.0 + lax.erf(h / jnp.sqrt(2.0)))
    mu = jnp.mean(h, axis=-1, keepdims=True)
    var = jnp.mean((h - mu) ** 2, axis=-1, keepdims=True)
    hn = (h - mu) * lax.rsqrt(var + eps) * gamma + beta
    return (hn @ w2.astype(jnp.float32) + b2).astype(hidden_state.dtype)


if __name__ == "__main__":
    # Small config: batch=2, seq=8, hidden=32, vocab=128
    B, S, H, V = 2, 8, 32, 128

    key = jax.random.PRNGKey(0)
    k_x, k_w1, k_b1, k_w2 = jax.random.split(key, 4)

    hidden_state = jax.random.normal(k_x, (B, S, H), dtype=jnp.float32)

    # Deterministic parameter init (synthetic, not a checkpoint load)
    w1 = jax.random.normal(k_w1, (H, H), dtype=jnp.float32) * 0.02   # dense.weight.T
    b1 = jax.random.normal(k_b1, (H,), dtype=jnp.float32) * 0.02     # dense.bias
    gamma = jnp.ones((H,), dtype=jnp.float32)                        # layer_norm.weight
    beta = jnp.zeros((H,), dtype=jnp.float32)                        # layer_norm.bias
    w2 = jax.random.normal(k_w2, (H, V), dtype=jnp.float32) * 0.02   # decoder.weight.T
    b2 = jnp.zeros((V,), dtype=jnp.float32)                          # shared self.bias

    out = lm_head(hidden_state, w1, b1, gamma, beta, w2, b2)
    out = jax.block_until_ready(out)

    ref = lm_head_ref(hidden_state, w1, b1, gamma, beta, w2, b2)
    assert out.shape == (B, S, V)
    assert jnp.allclose(out, ref, rtol=1e-4, atol=1e-4)

    print("KERNEL_OK")
</pallas_src>

<mosaic_0001>
module attributes {stable_mosaic.version = 11 : i64} {
  func.func @_lm_head_kernel(%arg0: i32, %arg1: i32, %arg2: memref<16x32xf32, #tpu.memory_space<vmem>>, %arg3: memref<32x32xf32, #tpu.memory_space<vmem>>, %arg4: memref<1x32xf32, #tpu.memory_space<vmem>>, %arg5: memref<1x32xf32, #tpu.memory_space<vmem>>, %arg6: memref<1x32xf32, #tpu.memory_space<vmem>>, %arg7: memref<32x128xf32, #tpu.memory_space<vmem>>, %arg8: memref<1x128xf32, #tpu.memory_space<vmem>>, %arg9: memref<16x128xf32, #tpu.memory_space<vmem>>, %arg10: memref<16x32xf32, #tpu.memory_space<vmem>>) attributes {dimension_semantics = [#tpu.dimension_semantics<parallel>, #tpu.dimension_semantics<arbitrary>], iteration_bounds = array<i64: 1, 1>, scalar_prefetch = 0 : i64, scratch_operands = 1 : i64, tpu.core_type = #tpu.core_type<tc>, window_params = [{transform_indices = @transform_0, window_bounds = array<i64: 16, 32>}, {pipeline_mode = #tpu.pipeline_mode<synchronous>, transform_indices = @transform_1, window_bounds = array<i64: 32, 32>}, {pipeline_mode = #tpu.pipeline_mode<synchronous>, transform_indices = @transform_2, window_bounds = array<i64: 1, 32>}, {pipeline_mode = #tpu.pipeline_mode<synchronous>, transform_indices = @transform_3, window_bounds = array<i64: 1, 32>}, {pipeline_mode = #tpu.pipeline_mode<synchronous>, transform_indices = @transform_4, window_bounds = array<i64: 1, 32>}, {transform_indices = @transform_5, window_bounds = array<i64: 32, 128>}, {transform_indices = @transform_6, window_bounds = array<i64: 1, 128>}, {transform_indices = @transform_7, window_bounds = array<i64: 16, 128>}]} {
    %c0_i32 = arith.constant 0 : i32
    %0 = arith.cmpi eq, %arg1, %c0_i32 : i32
    %1 = arith.extui %0 : i1 to i32
    %c0_i32_0 = arith.constant 0 : i32
    %2 = arith.cmpi ne, %1, %c0_i32_0 : i32
    scf.if %2 {
      %c0_8 = arith.constant 0 : index
      %c0_9 = arith.constant 0 : index
      %10 = vector.load %arg2[%c0_8, %c0_9] : memref<16x32xf32, #tpu.memory_space<vmem>>, vector<16x32xf32>
      %c0_10 = arith.constant 0 : index
      %c0_11 = arith.constant 0 : index
      %11 = vector.load %arg3[%c0_10, %c0_11] : memref<32x32xf32, #tpu.memory_space<vmem>>, vector<32x32xf32>
      %cst_12 = arith.constant dense<0.000000e+00> : vector<16x32xf32>
      %12 = tpu.matmul %10, %11, %cst_12 {dimension_numbers = #tpu.dot_dimension_numbers<[1], [0], [0], [1], [0, 0, 1, 1], [], []>} : vector<16x32xf32>, vector<32x32xf32>, vector<16x32xf32> -> vector<16x32xf32>
      %c0_13 = arith.constant 0 : index
      %c0_14 = arith.constant 0 : index
      %13 = vector.load %arg4[%c0_13, %c0_14] : memref<1x32xf32, #tpu.memory_space<vmem>>, vector<1x32xf32>
      %14 = vector.broadcast %13 : vector<1x32xf32> to vector<16x32xf32>
      %15 = arith.addf %12, %14 : vector<16x32xf32>
      %cst_15 = arith.constant 5.000000e-01 : f32
      %16 = vector.broadcast %cst_15 : f32 to vector<16x32xf32>
      %17 = arith.mulf %16, %15 : vector<16x32xf32>
      %cst_16 = arith.constant 0.707106769 : f32
      %18 = vector.broadcast %cst_16 : f32 to vector<16x32xf32>
      %19 = arith.mulf %15, %18 : vector<16x32xf32>
      %20 = math.erf %19 : vector<16x32xf32>
      %cst_17 = arith.constant 1.000000e+00 : f32
      %21 = vector.broadcast %cst_17 : f32 to vector<16x32xf32>
      %22 = arith.addf %21, %20 : vector<16x32xf32>
      %23 = arith.mulf %17, %22 : vector<16x32xf32>
      %cst_18 = arith.constant dense<0.000000e+00> : vector<16xf32>
      %24 = vector.multi_reduction <add>, %23, %cst_18 [1] : vector<16x32xf32> to vector<16xf32>
      %25 = vector.shape_cast %24 : vector<16xf32> to vector<16x1xf32>
      %cst_19 = arith.constant 3.200000e+01 : f32
      %26 = vector.broadcast %cst_19 : f32 to vector<16x1xf32>
      %27 = arith.divf %25, %26 : vector<16x1xf32>
      %28 = vector.broadcast %27 : vector<16x1xf32> to vector<16x32xf32>
      %29 = arith.subf %23, %28 : vector<16x32xf32>
      %30 = vector.broadcast %27 : vector<16x1xf32> to vector<16x32xf32>
      %31 = arith.subf %23, %30 : vector<16x32xf32>
      %32 = arith.mulf %29, %31 : vector<16x32xf32>
      %cst_20 = arith.constant dense<0.000000e+00> : vector<16xf32>
      %33 = vector.multi_reduction <add>, %32, %cst_20 [1] : vector<16x32xf32> to vector<16xf32>
      %34 = vector.shape_cast %33 : vector<16xf32> to vector<16x1xf32>
      %cst_21 = arith.constant 3.200000e+01 : f32
      %35 = vector.broadcast %cst_21 : f32 to vector<16x1xf32>
      %36 = arith.divf %34, %35 : vector<16x1xf32>
      %37 = vector.broadcast %27 : vector<16x1xf32> to vector<16x32xf32>
      %38 = arith.subf %23, %37 : vector<16x32xf32>
      %cst_22 = arith.constant 9.99999997E-7 : f32
      %39 = vector.broadcast %cst_22 : f32 to vector<16x1xf32>
      %40 = arith.addf %36, %39 : vector<16x1xf32>
      %41 = math.rsqrt %40 : vector<16x1xf32>
      %42 = vector.broadcast %41 : vector<16x1xf32> to vector<16x32xf32>
      %43 = arith.mulf %38, %42 : vector<16x32xf32>
      %c0_23 = arith.constant 0 : index
      %c0_24 = arith.constant 0 : index
      %44 = vector.load %arg5[%c0_23, %c0_24] : memref<1x32xf32, #tpu.memory_space<vmem>>, vector<1x32xf32>
      %45 = vector.broadcast %44 : vector<1x32xf32> to vector<16x32xf32>
      %46 = arith.mulf %43, %45 : vector<16x32xf32>
      %c0_25 = arith.constant 0 : index
      %c0_26 = arith.constant 0 : index
      %47 = vector.load %arg6[%c0_25, %c0_26] : memref<1x32xf32, #tpu.memory_space<vmem>>, vector<1x32xf32>
      %48 = vector.broadcast %47 : vector<1x32xf32> to vector<16x32xf32>
      %49 = arith.addf %46, %48 : vector<16x32xf32>
      %c0_27 = arith.constant 0 : index
      %c0_28 = arith.constant 0 : index
      %50 = vector.load %arg10[%c0_27, %c0_28] : memref<16x32xf32, #tpu.memory_space<vmem>>, vector<16x32xf32>
      tpu.vector_store %arg10[%c0_27, %c0_28], %49 {strides = array<i32>} : memref<16x32xf32, #tpu.memory_space<vmem>>, vector<16x32xf32>,
    } else {
    }
    %c0 = arith.constant 0 : index
    %c0_1 = arith.constant 0 : index
    %3 = vector.load %arg10[%c0, %c0_1] : memref<16x32xf32, #tpu.memory_space<vmem>>, vector<16x32xf32>
    %c0_2 = arith.constant 0 : index
    %c0_3 = arith.constant 0 : index
    %4 = vector.load %arg7[%c0_2, %c0_3] : memref<32x128xf32, #tpu.memory_space<vmem>>, vector<32x128xf32>
    %cst = arith.constant dense<0.000000e+00> : vector<16x128xf32>
    %5 = tpu.matmul %3, %4, %cst {dimension_numbers = #tpu.dot_dimension_numbers<[1], [0], [0], [1], [0, 0, 1, 1], [], []>} : vector<16x32xf32>, vector<32x128xf32>, vector<16x128xf32> -> vector<16x128xf32>
    %c0_4 = arith.constant 0 : index
    %c0_5 = arith.constant 0 : index
    %6 = vector.load %arg8[%c0_4, %c0_5] : memref<1x128xf32, #tpu.memory_space<vmem>>, vector<1x128xf32>
    %7 = vector.broadcast %6 : vector<1x128xf32> to vector<16x128xf32>
    %8 = arith.addf %5, %7 : vector<16x128xf32>
    %c0_6 = arith.constant 0 : index
    %c0_7 = arith.constant 0 : index
    %9 = vector.load %arg9[%c0_6, %c0_7] : memref<16x128xf32, #tpu.memory_space<vmem>>, vector<16x128xf32>
    tpu.vector_store %arg9[%c0_6, %c0_7], %8 {strides = array<i32>} : memref<16x128xf32, #tpu.memory_space<vmem>>, vector<16x128xf32>,
    return
  }
  func.func @transform_0(%arg0: i32, %arg1: i32) -> (i32, i32) {
    %c0_i32 = arith.constant 0 : i32
    %c0_i32_0 = arith.constant 0 : i32
    return %arg0, %c0_i32 : i32, i32
  }
  func.func @transform_1(%arg0: i32, %arg1: i32) -> (i32, i32) {
    %c0_i32 = arith.constant 0 : i32
    %c0_i32_0 = arith.constant 0 : i32
    %c0_i32_1 = arith.constant 0 : i32
    return %c0_i32, %c0_i32_0 : i32, i32
  }
  func.func @transform_2(%arg0: i32, %arg1: i32) -> (i32, i32) {
    %c0_i32 = arith.constant 0 : i32
    %c0_i32_0 = arith.constant 0 : i32
    %c0_i32_1 = arith.constant 0 : i32
    return %c0_i32, %c0_i32_0 : i32, i32
  }
  func.func @transform_3(%arg0: i32, %arg1: i32) -> (i32, i32) {
    %c0_i32 = arith.constant 0 : i32
    %c0_i32_0 = arith.constant 0 : i32
    %c0_i32_1 = arith.constant 0 : i32
    return %c0_i32, %c0_i32_0 : i32, i32
  }
  func.func @transform_4(%arg0: i32, %arg1: i32) -> (i32, i32) {
    %c0_i32 = arith.constant 0 : i32
    %c0_i32_0 = arith.constant 0 : i32
    %c0_i32_1 = arith.constant 0 : i32
    return %c0_i32, %c0_i32_0 : i32, i32
  }
  func.func @transform_5(%arg0: i32, %arg1: i32) -> (i32, i32) {
    %c0_i32 = arith.constant 0 : i32
    %c0_i32_0 = arith.constant 0 : i32
    return %c0_i32, %arg1 : i32, i32
  }
  func.func @transform_6(%arg0: i32, %arg1: i32) -> (i32, i32) {
    %c0_i32 = arith.constant 0 : i32
    %c0_i32_0 = arith.constant 0 : i32
    return %c0_i32, %arg1 : i32, i32
  }
  func.func @transform_7(%arg0: i32, %arg1: i32) -> (i32, i32) {
    %c0_i32 = arith.constant 0 : i32
    return %arg0, %arg1 : i32, i32
  }
}

</mosaic_0001>

<llo_original>
// kernel: tpu_custom_call.1
$region0: #{tpu_custom_call.1}
  #allocation0 [shape = 'u32[]', space=smem, size = 0x4, offset = 0x4, fixed_abs, tag = 'smem constant byte address 0x4 - core index']
  #allocation1 [shape = 'u32[144,128]{1,0:T(1,128)}', space=vmem, size = 0x12000, scoped, tag = 'internal scratch']
  #allocation2 [shape = 'f32[16,32]{1,0:T(8,128)}', space=vmem, size = 0x2000, scoped, tag = 'scratch operand']
  %s0 = inlined_call_operand.hbm [shape: f32[16,32], index: 0, kind: input, shape index: {}]
  %s1 = inlined_call_operand.hbm [shape: f32[32,32], index: 1, kind: input, shape index: {}]
  %s2 = inlined_call_operand.vmem [shape: f32[1,32], index: 2, kind: input, shape index: {}]
  %s3 = inlined_call_operand.vmem [shape: f32[1,32], index: 3, kind: input, shape index: {}]
  %s4 = inlined_call_operand.vmem [shape: f32[1,32], index: 4, kind: input, shape index: {}]
  %s5 = inlined_call_operand.hbm [shape: f32[32,128], index: 5, kind: input, shape index: {}]
  %s6 = inlined_call_operand.vmem [shape: f32[1,128], index: 6, kind: input, shape index: {}]
  %s7 = inlined_call_operand.hbm [shape: f32[16,128], index: 7, kind: output, shape index: {}]
  %s8 = sld [smem:[#allocation0]]
  $region54: #{tpu_custom_call.1} parent=0
    _
  %s10 = ssub.s32 1, %s8
  %s11 = scalar_select 0, %s10, %s8
  $region1: #{tpu_custom_call.1} parent=0
    #allocation3 [shape = 'u8[8192]{0}', space=vmem, size = 0x2000, scoped, tag = 'input window, operand 0, single buffered']
    #allocation4 [shape = 's32[1]{0}', space=sflag, size = 0x4, scoped, tag = 'scoped memory for tpu_custom_call.1']
    #allocation5 [shape = 's32[1]{0}', space=sflag, size = 0x4, scoped, tag = 'scoped memory for tpu_custom_call.1']
    #allocation6 [shape = 'u8[16384]{0}', space=vmem, size = 0x4000, scoped, tag = 'input window, operand 1, single buffered']
    #allocation7 [shape = 's32[1]{0}', space=sflag, size = 0x4, scoped, tag = 'scoped memory for tpu_custom_call.1']
    #allocation8 [shape = 'u8[16384]{0}', space=vmem, size = 0x4000, scoped, tag = 'input window, operand 5, single buffered']
    #allocation9 [shape = 'u8[8192]{0}', space=vmem, size = 0x2000, scoped, tag = 'output window, operand 0, single buffered']
    %12 = vsyncpa [#allocation4], 0
    %13 = vsyncpa [#allocation7], 0
    %14 = vsyncpa [#allocation5], 0
    // Predicated region
    $region2: #{tpu_custom_call.1} parent=1 // pred_check
      _
    $region3: #{tpu_custom_call.1} parent=1 // pred_check_branch
      %16 = sbr.rel (0) target = $region5
    $region4: #{tpu_custom_call.1} parent=1 // pred_region
      %s18 = ssub.s32 256, 256
      %19 = vsyncadd [#allocation4], %s18
      %s20 = sshll.u32 [#allocation3], 4
      %s21 = int_to_ptr.vmem [resolvable:$true] %s20
      %26 = dma.hbm_to_vmem [thread:$0]  %s0, 256, %s21, [#allocation4], 128, 128, 8
    $region5: #{tpu_custom_call.1} parent=1 // pred_fallthru
      _
    // Predicated region
    $region6: #{tpu_custom_call.1} parent=1 // pred_check
      _
    $region7: #{tpu_custom_call.1} parent=1 // pred_check_branch
      %28 = sbr.rel (0) target = $region9
    $region8: #{tpu_custom_call.1} parent=1 // pred_region
      %s30 = ssub.s32 512, 512
      %31 = vsyncadd [#allocation7], %s30
      %s32 = sshll.u32 [#allocation6], 4
      %s33 = int_to_ptr.vmem [resolvable:$true] %s32
      %38 = dma.hbm_to_vmem [thread:$0]  %s1, 512, %s33, [#allocation7], 128, 128, 8
    $region9: #{tpu_custom_call.1} parent=1 // pred_fallthru
      _
    // Predicated region
    $region10: #{tpu_custom_call.1} parent=1 // pred_check
      _
    $region11: #{tpu_custom_call.1} parent=1 // pred_check_branch
      %40 = sbr.rel (0) target = $region13
    $region12: #{tpu_custom_call.1} parent=1 // pred_region
      _
    $region13: #{tpu_custom_call.1} parent=1 // pred_fallthru
      _
    // Predicated region
    $region14: #{tpu_custom_call.1} parent=1 // pred_check
      _
    $region15: #{tpu_custom_call.1} parent=1 // pred_check_branch
      %42 = sbr.rel (0) target = $region17
    $region16: #{tpu_custom_call.1} parent=1 // pred_region
      _
    $region17: #{tpu_custom_call.1} parent=1 // pred_fallthru
      _
    // Predicated region
    $region18: #{tpu_custom_call.1} parent=1 // pred_check
      _
    $region19: #{tpu_custom_call.1} parent=1 // pred_check_branch
      %44 = sbr.rel (0) target = $region21
    $region20: #{tpu_custom_call.1} parent=1 // pred_region
      _
    $region21: #{tpu_custom_call.1} parent=1 // pred_fallthru
      _
    // Predicated region
    $region22: #{tpu_custom_call.1} parent=1 // pred_check
      _
    $region23: #{tpu_custom_call.1} parent=1 // pred_check_branch
      %46 = sbr.rel (0) target = $region25
    $region24: #{tpu_custom_call.1} parent=1 // pred_region
      %s48 = ssub.s32 512, 512
      %49 = vsyncadd [#allocation7], %s48
      %s50 = sshll.u32 [#allocation8], 4
      %s51 = int_to_ptr.vmem [resolvable:$true] %s50
      %56 = dma.hbm_to_vmem [thread:$0]  %s5, 512, %s51, [#allocation7], 128, 128, 8
    $region25: #{tpu_custom_call.1} parent=1 // pred_fallthru
      _
    // Predicated region
    $region26: #{tpu_custom_call.1} parent=1 // pred_check
      _
    $region27: #{tpu_custom_call.1} parent=1 // pred_check_branch
      %58 = sbr.rel (0) target = $region29
    $region28: #{tpu_custom_call.1} parent=1 // pred_region
      _
    $region29: #{tpu_custom_call.1} parent=1 // pred_fallthru
      _
    // Predicated region
    $region30: #{tpu_custom_call.1} parent=1 // pred_check
      _
    $region31: #{tpu_custom_call.1} parent=1 // pred_check_branch
      %60 = sbr.rel (0) target = $region33
    $region32: #{tpu_custom_call.1} parent=1 // pred_region
      %61 = dma.done [#allocation4], 256
    $region33: #{tpu_custom_call.1} parent=1 // pred_fallthru
      _
    // Predicated region
    $region34: #{tpu_custom_call.1} parent=1 // pred_check
      _
    $region35: #{tpu_custom_call.1} parent=1 // pred_check_branch
      %63 = sbr.rel (0) target = $region37
    $region36: #{tpu_custom_call.1} parent=1 // pred_region
      %64 = dma.done [#allocation7], 512
    $region37: #{tpu_custom_call.1} parent=1 // pred_fallthru
      _
    // Predicated region
    $region38: #{tpu_custom_call.1} parent=1 // pred_check
      _
    $region39: #{tpu_custom_call.1} parent=1 // pred_check_branch
      %66 = sbr.rel (0) target = $region41
    $region40: #{tpu_custom_call.1} parent=1 // pred_region
      %67 = dma.done [#allocation7], 512
    $region41: #{tpu_custom_call.1} parent=1 // pred_fallthru
      _
    %p68 = scmp.eq.s32.totalorder 0, 0
    // Predicated region
    $region42: #{tpu_custom_call.1} parent=1 // pred_check
      %p69 = pneg %p68
    $region43: #{tpu_custom_call.1} parent=1 // pred_check_branch
      %71 = sbr.rel (%p69) target = $region45
    $region44: #{tpu_custom_call.1} parent=1 // pred_region
      %v72 = vld [vmem:[#allocation3] sm:$0xff]
      %v73 = vld [vmem:[#allocation3 + $0x8] sm:$0xff]
      %v74 = vld [vmem:[#allocation6] sm:$0xff]
      %v75 = vld [vmem:[#allocation6 + $0x8] sm:$0xff]
      %v76 = vld [vmem:[#allocation6 + $0x10] sm:$0xff]
      %v77 = vld [vmem:[#allocation6 + $0x18] sm:$0xff]
      %v78 = vld [vmem:[%s2] sm:$0x1]
      %v80 = vlaneseq
      %v81 = vshrl.u32 %v80, 7
      %v82 = vsub.s32 0, %v81
      %v83 = vrot.slane %v78, %v82
      %vm85 = vcmask 261120
      %v87 = vsel %vm85, %v72, 0
      %v90 = vsel %vm85, %v73, 0
      %92 = vmatprep.subr.mxu0 0.0
      %93 = vmatpush1.msra.mxu0 %v74
      %94 = vmatprep.subr.mxu0 0.0
      %95 = vmatpush1.msra.mxu0 %v75
      %96 = vmatprep.subr.mxu0 0.0
      %97 = vmatpush1.msra.mxu0 %v76
      %98 = vmatprep.subr.mxu0 0.0
      %99 = vmatpush1.msra.mxu0 %v77
      %100 = vmatprep.subr.mxu0 0.0
      %101 = vmatpush1.msra.mxu0 0.0
      %102 = vmatprep.subr.mxu0 0.0
      %103 = vmatpush1.msra.mxu0 0.0
      %104 = vmatprep.subr.mxu0 0.0
      %105 = vmatpush1.msra.mxu0 0.0
      %106 = vmatprep.subr.mxu0 0.0
      %107 = vmatpush1.msra.mxu0 0.0
      %108 = vmatprep.subr.mxu0 0.0
      %109 = vmatpush1.msra.mxu0 0.0
      %110 = vmatprep.subr.mxu0 0.0
      %111 = vmatpush1.msra.mxu0 0.0
      %112 = vmatprep.subr.mxu0 0.0
      %113 = vmatpush1.msra.mxu0 0.0
      %114 = vmatprep.subr.mxu0 0.0
      %115 = vmatpush1.msra.mxu0 0.0
      %116 = vmatprep.subr.mxu0 0.0
      %117 = vmatpush1.msra.mxu0 0.0
      %118 = vmatprep.subr.mxu0 0.0
      %119 = vmatpush1.msra.mxu0 0.0
      %120 = vmatprep.subr.mxu0 0.0
      %121 = vmatpush1.msra.mxu0 0.0
      %122 = vmatprep.subr.mxu0 0.0
      %123 = vmatpush1.msra.mxu0 0.0
      %124 = vmatprep.subr.mxu0 0.0
      %125 = vmatpush1.msra.mxu0 0.0
      %126 = vmatprep.subr.mxu0 0.0
      %127 = vmatpush1.msra.mxu0 0.0
      %128 = vmatprep.subr.mxu0 0.0
      %129 = vmatpush1.msra.mxu0 0.0
      %130 = vmatprep.subr.mxu0 0.0
      %131 = vmatpush1.msra.mxu0 0.0
      %132 = vmatprep.subr.mxu0 0.0
      %133 = vmatpush1.msra.mxu0 0.0
      %134 = vmatprep.subr.mxu0 0.0
      %135 = vmatpush1.msra.mxu0 0.0
      %136 = vmatprep.subr.mxu0 0.0
      %137 = vmatpush1.msra.mxu0 0.0
      %138 = vmatprep.subr.mxu0 0.0
      %139 = vmatpush1.msra.mxu0 0.0
      %140 = vmatprep.subr.mxu0 0.0
      %141 = vmatpush1.msra.mxu0 0.0
      %142 = vmatprep.subr.mxu0 0.0
      %143 = vmatpush1.msra.mxu0 0.0
      %144 = vmatprep.subr.mxu0 0.0
      %145 = vmatpush1.msra.mxu0 0.0
      %146 = vmatprep.subr.mxu0 0.0
      %147 = vmatpush1.msra.mxu0 0.0
      %148 = vmatprep.subr.mxu0 0.0
      %149 = vmatpush1.msra.mxu0 0.0
      %150 = vmatprep.subr.mxu0 0.0
      %151 = vmatpush1.msra.mxu0 0.0
      %152 = vmatprep.subr.mxu0 0.0
      %153 = vmatpush1.msra.mxu0 0.0
      %154 = vmatprep.subr.mxu0 0.0
      %155 = vmatpush1.msra.mxu0 0.0
      %156 = vmatprep.mubr.f32.mxu0 0.0
      %157 = vmatmul.mubr.f32.gmra.mrb[0].mxu0 %v87
      %v158 = vpop.f32.mrb[0].mxu0
      %v159 = vadd.f32 %v83, %v158
      %v160 = vpop.f32.mrb[0].mxu0
      %161 = vmatprep.mubr.f32.mxu0 0.0
      %162 = vmatmul.mubr.f32.gmra.mrb[0].mxu0 %v90
      %v163 = vpop.f32.mrb[0].mxu0
      %v164 = vadd.f32 %v83, %v163
      %v165 = vpop.f32.mrb[0].mxu0
      %166 = vdwg.mxu0
      %v167 = vmul.f32 %v159, 0.5
      %v168 = vmul.f32 %v164, 0.5
      %v169 = vmul.f32 %v159, 0.70710677
      %v170 = vmul.f32 %v164, 0.70710677
      %v171 = verf.f32.pop %v169
      %v172 = verf.f32.pop %v170
      %v173 = vadd.f32 %v171, 1.0
      %v174 = vadd.f32 %v172, 1.0
      %v175 = vmul.f32 %v167, %v173
      %v176 = vmul.f32 %v168, %v174
      %v177 = vsel %vm85, %v175, 0.0
      %178 = vadd.xlane.f32.xlu0 %v177
      %v179 = vpop.xlane.xlu0 %178
      %v180 = vsel %vm85, %v176, 0.0
      %181 = vadd.xlane.f32.xlu0 %v180
      %v182 = vpop.xlane.xlu0 %181
      %v183 = vrcp.pop 32.0
      %v184 = vmul.f32 %v179, %v183
      %v185 = vmul.f32 %v182, %v183
      %v186 = vsub.f32 %v175, %v184
      %v187 = vsub.f32 %v176, %v185
      %v188 = vmul.f32 %v186, %v186
      %v189 = vmul.f32 %v187, %v187
      %v190 = vsel %vm85, %v188, 0.0
      %191 = vadd.xlane.f32.xlu0 %v190
      %v192 = vpop.xlane.xlu0 %191
      %v193 = vsel %vm85, %v189, 0.0
      %194 = vadd.xlane.f32.xlu0 %v193
      %v195 = vpop.xlane.xlu0 %194
      %v196 = vmul.f32 %v192, %v183
      %v197 = vmul.f32 %v195, %v183
      %v198 = vadd.f32 %v196, 1e-06
      %v199 = vadd.f32 %v197, 1e-06
      %v200 = vrsqrt.pop %v198
      %v201 = vrsqrt.pop %v199
      %v202 = vmul.f32 %v186, %v200
      %v203 = vmul.f32 %v187, %v201
      %v204 = vld [vmem:[%s3] sm:$0x1]
      %v206 = vlaneseq
      %v207 = vshrl.u32 %v206, 7
      %v208 = vsub.s32 0, %v207
      %v209 = vrot.slane %v204, %v208
      %v211 = vmul.f32 %v202, %v209
      %v212 = vmul.f32 %v203, %v209
      %v213 = vld [vmem:[%s4] sm:$0x1]
      %v215 = vlaneseq
      %v216 = vshrl.u32 %v215, 7
      %v217 = vsub.s32 0, %v216
      %v218 = vrot.slane %v213, %v217
      %v220 = vadd.f32 %v211, %v218
      %v221 = vadd.f32 %v212, %v218
      %222 = vst.msk [vmem:[#allocation2] sm:$0xff] %vm85, %v220
      %223 = vst.msk [vmem:[#allocation2 + $0x8] sm:$0xff] %vm85, %v221
    $region45: #{tpu_custom_call.1} parent=1 // pred_fallthru
      _
    %v224 = vld [vmem:[#allocation2] sm:$0xff]
    %v225 = vld [vmem:[#allocation2 + $0x8] sm:$0xff]
    %v226 = vld [vmem:[#allocation8] sm:$0xff]
    %v227 = vld [vmem:[#allocation8 + $0x8] sm:$0xff]
    %v228 = vld [vmem:[#allocation8 + $0x10] sm:$0xff]
    %v229 = vld [vmem:[#allocation8 + $0x18] sm:$0xff]
    %v230 = vld [vmem:[%s6] sm:$0x1]
    %v232 = vlaneseq
    %v233 = vshrl.u32 %v232, 7
    %v234 = vsub.s32 0, %v233
    %v235 = vrot.slane %v230, %v234
    %vm237 = vcmask 261120
    %v239 = vsel %vm237, %v224, 0
    %v242 = vsel %vm237, %v225, 0
    %244 = vmatprep.subr.mxu0 0.0
    %245 = vmatpush1.msra.mxu0 %v226
    %246 = vmatprep.subr.mxu0 0.0
    %247 = vmatpush1.msra.mxu0 %v227
    %248 = vmatprep.subr.mxu0 0.0
    %249 = vmatpush1.msra.mxu0 %v228
    %250 = vmatprep.subr.mxu0 0.0
    %251 = vmatpush1.msra.mxu0 %v229
    %252 = vmatprep.subr.mxu0 0.0
    %253 = vmatpush1.msra.mxu0 0.0
    %254 = vmatprep.subr.mxu0 0.0
    %255 = vmatpush1.msra.mxu0 0.0
    %256 = vmatprep.subr.mxu0 0.0
    %257 = vmatpush1.msra.mxu0 0.0
    %258 = vmatprep.subr.mxu0 0.0
    %259 = vmatpush1.msra.mxu0 0.0
    %260 = vmatprep.subr.mxu0 0.0
    %261 = vmatpush1.msra.mxu0 0.0
    %262 = vmatprep.subr.mxu0 0.0
    %263 = vmatpush1.msra.mxu0 0.0
    %264 = vmatprep.subr.mxu0 0.0
    %265 = vmatpush1.msra.mxu0 0.0
    %266 = vmatprep.subr.mxu0 0.0
    %267 = vmatpush1.msra.mxu0 0.0
    %268 = vmatprep.subr.mxu0 0.0
    %269 = vmatpush1.msra.mxu0 0.0
    %270 = vmatprep.subr.mxu0 0.0
    %271 = vmatpush1.msra.mxu0 0.0
    %272 = vmatprep.subr.mxu0 0.0
    %273 = vmatpush1.msra.mxu0 0.0
    %274 = vmatprep.subr.mxu0 0.0
    %275 = vmatpush1.msra.mxu0 0.0
    %276 = vmatprep.subr.mxu0 0.0
    %277 = vmatpush1.msra.mxu0 0.0
    %278 = vmatprep.subr.mxu0 0.0
    %279 = vmatpush1.msra.mxu0 0.0
    %280 = vmatprep.subr.mxu0 0.0
    %281 = vmatpush1.msra.mxu0 0.0
    %282 = vmatprep.subr.mxu0 0.0
    %283 = vmatpush1.msra.mxu0 0.0
    %284 = vmatprep.subr.mxu0 0.0
    %285 = vmatpush1.msra.mxu0 0.0
    %286 = vmatprep.subr.mxu0 0.0
    %287 = vmatpush1.msra.mxu0 0.0
    %288 = vmatprep.subr.mxu0 0.0
    %289 = vmatpush1.msra.mxu0 0.0
    %290 = vmatprep.subr.mxu0 0.0
    %291 = vmatpush1.msra.mxu0 0.0
    %292 = vmatprep.subr.mxu0 0.0
    %293 = vmatpush1.msra.mxu0 0.0
    %294 = vmatprep.subr.mxu0 0.0
    %295 = vmatpush1.msra.mxu0 0.0
    %296 = vmatprep.subr.mxu0 0.0
    %297 = vmatpush1.msra.mxu0 0.0
    %298 = vmatprep.subr.mxu0 0.0
    %299 = vmatpush1.msra.mxu0 0.0
    %300 = vmatprep.subr.mxu0 0.0
    %301 = vmatpush1.msra.mxu0 0.0
    %302 = vmatprep.subr.mxu0 0.0
    %303 = vmatpush1.msra.mxu0 0.0
    %304 = vmatprep.subr.mxu0 0.0
    %305 = vmatpush1.msra.mxu0 0.0
    %306 = vmatprep.subr.mxu0 0.0
    %307 = vmatpush1.msra.mxu0 0.0
    %308 = vmatprep.mubr.f32.mxu0 0.0
    %309 = vmatmul.mubr.f32.gmra.mrb[0].mxu0 %v239
    %v310 = vpop.f32.mrb[0].mxu0
    %v311 = vadd.f32 %v235, %v310
    %v312 = vpop.f32.mrb[0].mxu0
    %313 = vmatprep.mubr.f32.mxu0 0.0
    %314 = vmatmul.mubr.f32.gmra.mrb[0].mxu0 %v242
    %v315 = vpop.f32.mrb[0].mxu0
    %v316 = vadd.f32 %v235, %v315
    %v317 = vpop.f32.mrb[0].mxu0
    %318 = vdwg.mxu0
    %319 = vst [vmem:[#allocation9] sm:$0xff] %v311
    %320 = vst [vmem:[#allocation9 + $0x8] sm:$0xff] %v316
    // Predicated region
    $region46: #{tpu_custom_call.1} parent=1 // pred_check
      _
    $region47: #{tpu_custom_call.1} parent=1 // pred_check_branch
      %322 = sbr.rel (0) target = $region49
    $region48: #{tpu_custom_call.1} parent=1 // pred_region
      %s324 = ssub.s32 256, 256
      %325 = vsyncadd [#allocation5], %s324
      %s326 = sshll.u32 [#allocation9], 4
      %s327 = int_to_ptr.vmem [resolvable:$true] %s326
      %332 = dma.vmem_to_hbm [thread:$0]  %s327, 256, %s7, [#allocation5], 128, 128, 8
    $region49: #{tpu_custom_call.1} parent=1 // pred_fallthru
      _
    // Predicated region
    $region50: #{tpu_custom_call.1} parent=1 // pred_check
      _
    $region51: #{tpu_custom_call.1} parent=1 // pred_check_branch
      %334 = sbr.rel (0) target = $region53
    $region52: #{tpu_custom_call.1} parent=1 // pred_region
      %335 = dma.done [#allocation5], 256
    $region53: #{tpu_custom_call.1} parent=1 // pred_fallthru
      _
    %336 = vsyncpa [#allocation4], 1
    %337 = vsyncpa [#allocation7], 1
    %338 = vsyncpa [#allocation5], 1

</llo_original>
